<compile_context>
chip_gen: v5e
topology: v5e:2x2
jax: 0.10.0
libtpu: 0.0.40
codegen_flags: <defaults>
</compile_context>

<pallas_src>
import functools
import math

import jax
import jax.numpy as jnp
from jax import lax
from jax.experimental import pallas as pl
from jax.experimental.pallas import tpu as pltpu


def _stats_kernel(x_ref, w_ref, gamma_ref, beta_ref, scale_ref, shift_ref,
                  sum_sc, sq_sc, *, n_rows, eps):
    """Pass 1: accumulate per-channel sum / sum-sq of emb = x @ W, then fold
    mean/var/gamma/beta into a single (1, C) scale and shift (written once)."""
    i = pl.program_id(0)
    tm = x_ref.shape[0]
    c = w_ref.shape[1]

    @pl.when(i == 0)
    def _():
        sum_sc[...] = jnp.zeros_like(sum_sc)
        sq_sc[...] = jnp.zeros_like(sq_sc)

    # f32 -> bf16 cast in-kernel (no wrapper-side XLA cast pass), f32 MXU accum.
    emb = jnp.dot(x_ref[...].astype(jnp.bfloat16), w_ref[...],
                  preferred_element_type=jnp.float32)            # (tm, C) f32

    if n_rows % tm != 0:
        # Ragged last tile: zero out-of-range rows before accumulating stats.
        row = i * tm + lax.broadcasted_iota(jnp.int32, (tm, 1), 0)
        emb = jnp.where(row < n_rows, emb, 0.0)

    sq = emb * emb
    pad = (-tm) % 8
    if pad:  # only possible when rows < 8 (full-array tile); keep 8-row alignment
        z = jnp.zeros((pad, c), jnp.float32)
        emb = jnp.concatenate([emb, z], axis=0)
        sq = jnp.concatenate([sq, z], axis=0)

    # Keep 8 sublanes live: plain VPU adds per tile, one XLU reduce at the end.
    sum_sc[...] += emb.reshape(-1, 8, c).sum(axis=0)
    sq_sc[...] += sq.reshape(-1, 8, c).sum(axis=0)

    @pl.when(i == pl.num_programs(0) - 1)
    def _():
        inv_n = 1.0 / float(n_rows)
        mean = jnp.sum(sum_sc[...], axis=0, keepdims=True) * inv_n       # (1, C)
        var = jnp.sum(sq_sc[...], axis=0, keepdims=True) * inv_n - mean * mean
        var = jnp.maximum(var, 0.0)          # guard E[x^2] - mean^2 cancellation
        scale = lax.rsqrt(var + eps) * gamma_ref[...]                    # fold gamma
        scale_ref[...] = scale
        shift_ref[...] = beta_ref[...] - mean * scale                    # fold mean/beta


def _apply_kernel(x_ref, w_ref, scale_ref, shift_ref, o_ref):
    """Pass 2: recompute emb = x @ W on the fly, apply per-channel FMA, store."""
    emb = jnp.dot(x_ref[...].astype(jnp.bfloat16), w_ref[...],
                  preferred_element_type=jnp.float32)            # (tm, C) f32
    o_ref[...] = emb * scale_ref[...] + shift_ref[...]


def _row_tile(rows):
    """Largest 8-aligned row tile (<= 2048 so blocks stay VMEM-safe on v7x)."""
    if rows <= 8:
        return rows
    for t in (2048, 1024, 512, 256, 128, 64, 32, 16, 8):
        if rows >= t:
            return t
    return 8


def embedding_forward(x, weight, gamma, beta, eps=1e-3):
    """x: (B, S, in_dim) f32; weight: (out_dim, in_dim) (PyTorch Linear layout)."""
    B, S, in_dim = x.shape
    out_dim = weight.shape[0]
    rows = B * S
    tm = _row_tile(rows)
    grid = (pl.cdiv(rows, tm),)

    x2 = x.reshape(rows, in_dim)                            # stays f32 in HBM
    w_t = weight.T.astype(jnp.bfloat16)                     # (in_dim, out_dim), tiny
    gamma2 = gamma.reshape(1, out_dim).astype(jnp.float32)
    beta2 = beta.reshape(1, out_dim).astype(jnp.float32)

    stats_kernel = functools.partial(_stats_kernel, n_rows=rows, eps=float(eps))
    scale, shift = pl.pallas_call(
        stats_kernel,
        out_shape=(
            jax.ShapeDtypeStruct((1, out_dim), jnp.float32),
            jax.ShapeDtypeStruct((1, out_dim), jnp.float32),
        ),
        grid=grid,
        in_specs=[
            pl.BlockSpec((tm, in_dim), lambda i: (i, 0)),
            pl.BlockSpec((in_dim, out_dim), lambda i: (0, 0)),
            pl.BlockSpec((1, out_dim), lambda i: (0, 0)),
            pl.BlockSpec((1, out_dim), lambda i: (0, 0)),
        ],
        out_specs=(
            pl.BlockSpec((1, out_dim), lambda i: (0, 0)),    # resident; written at last step
            pl.BlockSpec((1, out_dim), lambda i: (0, 0)),
        ),
        scratch_shapes=[
            pltpu.VMEM((8, out_dim), jnp.float32),           # per-channel sum
            pltpu.VMEM((8, out_dim), jnp.float32),           # per-channel sum of squares
        ],
        compiler_params=pltpu.CompilerParams(
            dimension_semantics=("arbitrary",)),             # sequential stats accumulation
    )(x2, w_t, gamma2, beta2)

    out = pl.pallas_call(
        _apply_kernel,
        out_shape=jax.ShapeDtypeStruct((rows, out_dim), jnp.float32),
        grid=grid,
        in_specs=[
            pl.BlockSpec((tm, in_dim), lambda i: (i, 0)),
            pl.BlockSpec((in_dim, out_dim), lambda i: (0, 0)),
            pl.BlockSpec((1, out_dim), lambda i: (0, 0)),
            pl.BlockSpec((1, out_dim), lambda i: (0, 0)),
        ],
        out_specs=pl.BlockSpec((tm, out_dim), lambda i: (i, 0)),
        compiler_params=pltpu.CompilerParams(
            dimension_semantics=("parallel",)),              # independent row tiles (megacore)
    )(x2, w_t, scale, shift)

    return out.reshape(B, S, out_dim)


if __name__ == "__main__":
    # Small shapes consistent with the module: batch=2, seq=8, in_dim=32, out_dim=128.
    B, S, in_dim, out_dim = 2, 8, 32, 128

    root = jax.random.PRNGKey(0)
    kx, kw, kg, kb = jax.random.split(root, 4)
    x = jax.random.normal(kx, (B, S, in_dim), dtype=jnp.float32)
    bound = 1.0 / math.sqrt(in_dim)
    weight = jax.random.uniform(kw, (out_dim, in_dim), jnp.float32, -bound, bound)
    gamma = 1.0 + 0.1 * jax.random.normal(kg, (out_dim,), jnp.float32)
    beta = 0.1 * jax.random.normal(kb, (out_dim,), jnp.float32)

    out = embedding_forward(x, weight, gamma, beta)
    jax.block_until_ready(out)

    # Plain-JAX reference: same bf16 matmul (f32 accum) + training-mode BatchNorm1d.
    emb_ref = jnp.dot(x.reshape(B * S, in_dim).astype(jnp.bfloat16),
                      weight.T.astype(jnp.bfloat16),
                      preferred_element_type=jnp.float32)
    mean = emb_ref.mean(axis=0, keepdims=True)
    var = emb_ref.var(axis=0, keepdims=True)       # biased, as PyTorch training mode
    ref = ((emb_ref - mean) * jax.lax.rsqrt(var + 1e-3) * gamma[None, :]
           + beta[None, :]).reshape(B, S, out_dim)

    assert out.shape == (B, S, out_dim) and out.dtype == jnp.float32
    assert bool(jnp.all(jnp.isfinite(out)))
    assert bool(jnp.allclose(out, ref, rtol=2e-2, atol=2e-2))
    # Undo the affine: per-channel ~zero mean / ~unit variance over B*S rows.
    o2 = (out.reshape(B * S, out_dim) - beta[None, :]) / gamma[None, :]
    assert bool(jnp.all(jnp.abs(o2.mean(axis=0)) < 1e-2))
    assert bool(jnp.all(jnp.abs(o2.var(axis=0) - 1.0) < 5e-2))

    print("KERNEL_OK")
</pallas_src>

<mosaic_0001>
module attributes {stable_mosaic.version = 11 : i64} {
  func.func @_stats_kernel(%arg0: i32, %arg1: memref<16x32xf32, #tpu.memory_space<vmem>>, %arg2: memref<32x128xbf16, #tpu.memory_space<vmem>>, %arg3: memref<1x128xf32, #tpu.memory_space<vmem>>, %arg4: memref<1x128xf32, #tpu.memory_space<vmem>>, %arg5: memref<1x128xf32, #tpu.memory_space<vmem>>, %arg6: memref<1x128xf32, #tpu.memory_space<vmem>>, %arg7: memref<8x128xf32, #tpu.memory_space<vmem>>, %arg8: memref<8x128xf32, #tpu.memory_space<vmem>>) attributes {dimension_semantics = [#tpu.dimension_semantics<arbitrary>], iteration_bounds = array<i64: 1>, scalar_prefetch = 0 : i64, scratch_operands = 2 : i64, tpu.core_type = #tpu.core_type<tc>, window_params = [{transform_indices = @transform_0, window_bounds = array<i64: 16, 32>}, {pipeline_mode = #tpu.pipeline_mode<synchronous>, transform_indices = @transform_1, window_bounds = array<i64: 32, 128>}, {pipeline_mode = #tpu.pipeline_mode<synchronous>, transform_indices = @transform_2, window_bounds = array<i64: 1, 128>}, {pipeline_mode = #tpu.pipeline_mode<synchronous>, transform_indices = @transform_3, window_bounds = array<i64: 1, 128>}, {pipeline_mode = #tpu.pipeline_mode<synchronous>, transform_indices = @transform_4, window_bounds = array<i64: 1, 128>}, {pipeline_mode = #tpu.pipeline_mode<synchronous>, transform_indices = @transform_5, window_bounds = array<i64: 1, 128>}]} {
    %c0_i32 = arith.constant 0 : i32
    %0 = arith.cmpi eq, %arg0, %c0_i32 : i32
    %1 = arith.extui %0 : i1 to i32
    %c0_i32_0 = arith.constant 0 : i32
    %2 = arith.cmpi ne, %1, %c0_i32_0 : i32
    scf.if %2 {
      %cst_16 = arith.constant 0.000000e+00 : f32
      %21 = vector.broadcast %cst_16 : f32 to vector<8x128xf32>
      %c0_17 = arith.constant 0 : index
      %c0_18 = arith.constant 0 : index
      %22 = vector.load %arg7[%c0_17, %c0_18] : memref<8x128xf32, #tpu.memory_space<vmem>>, vector<8x128xf32>
      tpu.vector_store %arg7[%c0_17, %c0_18], %21 {strides = array<i32>} : memref<8x128xf32, #tpu.memory_space<vmem>>, vector<8x128xf32>,
      %cst_19 = arith.constant 0.000000e+00 : f32
      %23 = vector.broadcast %cst_19 : f32 to vector<8x128xf32>
      %c0_20 = arith.constant 0 : index
      %c0_21 = arith.constant 0 : index
      %24 = vector.load %arg8[%c0_20, %c0_21] : memref<8x128xf32, #tpu.memory_space<vmem>>, vector<8x128xf32>
      tpu.vector_store %arg8[%c0_20, %c0_21], %23 {strides = array<i32>} : memref<8x128xf32, #tpu.memory_space<vmem>>, vector<8x128xf32>,
    } else {
    }
    %c0 = arith.constant 0 : index
    %c0_1 = arith.constant 0 : index
    %3 = vector.load %arg1[%c0, %c0_1] : memref<16x32xf32, #tpu.memory_space<vmem>>, vector<16x32xf32>
    %4 = arith.truncf %3 : vector<16x32xf32> to vector<16x32xbf16>
    %c0_2 = arith.constant 0 : index
    %c0_3 = arith.constant 0 : index
    %5 = vector.load %arg2[%c0_2, %c0_3] : memref<32x128xbf16, #tpu.memory_space<vmem>>, vector<32x128xbf16>
    %cst = arith.constant dense<0.000000e+00> : vector<16x128xf32>
    %6 = tpu.matmul %4, %5, %cst {dimension_numbers = #tpu.dot_dimension_numbers<[1], [0], [0], [1], [0, 0, 1, 1], [], []>} : vector<16x32xbf16>, vector<32x128xbf16>, vector<16x128xf32> -> vector<16x128xf32>
    %7 = arith.mulf %6, %6 : vector<16x128xf32>
    %c0_4 = arith.constant 0 : index
    %c0_5 = arith.constant 0 : index
    %8 = vector.load %arg7[%c0_4, %c0_5] : memref<8x128xf32, #tpu.memory_space<vmem>>, vector<8x128xf32>
    %9 = vector.shape_cast %6 : vector<16x128xf32> to vector<2x8x128xf32>
    %cst_6 = arith.constant dense<0.000000e+00> : vector<8x128xf32>
    %10 = vector.multi_reduction <add>, %9, %cst_6 [0] : vector<2x8x128xf32> to vector<8x128xf32>
    %11 = arith.addf %8, %10 : vector<8x128xf32>
    %c0_7 = arith.constant 0 : index
    %c0_8 = arith.constant 0 : index
    %12 = vector.load %arg7[%c0_7, %c0_8] : memref<8x128xf32, #tpu.memory_space<vmem>>, vector<8x128xf32>
    tpu.vector_store %arg7[%c0_7, %c0_8], %11 {strides = array<i32>} : memref<8x128xf32, #tpu.memory_space<vmem>>, vector<8x128xf32>,
    %c0_9 = arith.constant 0 : index
    %c0_10 = arith.constant 0 : index
    %13 = vector.load %arg8[%c0_9, %c0_10] : memref<8x128xf32, #tpu.memory_space<vmem>>, vector<8x128xf32>
    %14 = vector.shape_cast %7 : vector<16x128xf32> to vector<2x8x128xf32>
    %cst_11 = arith.constant dense<0.000000e+00> : vector<8x128xf32>
    %15 = vector.multi_reduction <add>, %14, %cst_11 [0] : vector<2x8x128xf32> to vector<8x128xf32>
    %16 = arith.addf %13, %15 : vector<8x128xf32>
    %c0_12 = arith.constant 0 : index
    %c0_13 = arith.constant 0 : index
    %17 = vector.load %arg8[%c0_12, %c0_13] : memref<8x128xf32, #tpu.memory_space<vmem>>, vector<8x128xf32>
    tpu.vector_store %arg8[%c0_12, %c0_13], %16 {strides = array<i32>} : memref<8x128xf32, #tpu.memory_space<vmem>>, vector<8x128xf32>,
    %c0_i32_14 = arith.constant 0 : i32
    %18 = arith.cmpi eq, %arg0, %c0_i32_14 : i32
    %19 = arith.extui %18 : i1 to i32
    %c0_i32_15 = arith.constant 0 : i32
    %20 = arith.cmpi ne, %19, %c0_i32_15 : i32
    scf.if %20 {
      %c0_16 = arith.constant 0 : index
      %c0_17 = arith.constant 0 : index
      %21 = vector.load %arg7[%c0_16, %c0_17] : memref<8x128xf32, #tpu.memory_space<vmem>>, vector<8x128xf32>
      %cst_18 = arith.constant dense<0.000000e+00> : vector<128xf32>
      %22 = vector.multi_reduction <add>, %21, %cst_18 [0] : vector<8x128xf32> to vector<128xf32>
      %23 = vector.shape_cast %22 : vector<128xf32> to vector<1x128xf32>
      %cst_19 = arith.constant 6.250000e-02 : f32
      %24 = vector.broadcast %cst_19 : f32 to vector<1x128xf32>
      %25 = arith.mulf %23, %24 : vector<1x128xf32>
      %c0_20 = arith.constant 0 : index
      %c0_21 = arith.constant 0 : index
      %26 = vector.load %arg8[%c0_20, %c0_21] : memref<8x128xf32, #tpu.memory_space<vmem>>, vector<8x128xf32>
      %cst_22 = arith.constant dense<0.000000e+00> : vector<128xf32>
      %27 = vector.multi_reduction <add>, %26, %cst_22 [0] : vector<8x128xf32> to vector<128xf32>
      %28 = vector.shape_cast %27 : vector<128xf32> to vector<1x128xf32>
      %cst_23 = arith.constant 6.250000e-02 : f32
      %29 = vector.broadcast %cst_23 : f32 to vector<1x128xf32>
      %30 = arith.mulf %28, %29 : vector<1x128xf32>
      %31 = arith.mulf %25, %25 : vector<1x128xf32>
      %32 = arith.subf %30, %31 : vector<1x128xf32>
      %cst_24 = arith.constant 0.000000e+00 : f32
      %33 = vector.broadcast %cst_24 : f32 to vector<1x128xf32>
      %34 = arith.maximumf %32, %33 : vector<1x128xf32>
      %cst_25 = arith.constant 1.000000e-03 : f32
      %35 = vector.broadcast %cst_25 : f32 to vector<1x128xf32>
      %36 = arith.addf %34, %35 : vector<1x128xf32>
      %37 = math.rsqrt %36 : vector<1x128xf32>
      %c0_26 = arith.constant 0 : index
      %c0_27 = arith.constant 0 : index
      %38 = vector.load %arg3[%c0_26, %c0_27] : memref<1x128xf32, #tpu.memory_space<vmem>>, vector<1x128xf32>
      %39 = arith.mulf %37, %38 : vector<1x128xf32>
      %c0_28 = arith.constant 0 : index
      %c0_29 = arith.constant 0 : index
      %40 = vector.load %arg5[%c0_28, %c0_29] : memref<1x128xf32, #tpu.memory_space<vmem>>, vector<1x128xf32>
      tpu.vector_store %arg5[%c0_28, %c0_29], %39 {strides = array<i32>} : memref<1x128xf32, #tpu.memory_space<vmem>>, vector<1x128xf32>,
      %c0_30 = arith.constant 0 : index
      %c0_31 = arith.constant 0 : index
      %41 = vector.load %arg4[%c0_30, %c0_31] : memref<1x128xf32, #tpu.memory_space<vmem>>, vector<1x128xf32>
      %42 = arith.mulf %25, %39 : vector<1x128xf32>
      %43 = arith.subf %41, %42 : vector<1x128xf32>
      %c0_32 = arith.constant 0 : index
      %c0_33 = arith.constant 0 : index
      %44 = vector.load %arg6[%c0_32, %c0_33] : memref<1x128xf32, #tpu.memory_space<vmem>>, vector<1x128xf32>
      tpu.vector_store %arg6[%c0_32, %c0_33], %43 {strides = array<i32>} : memref<1x128xf32, #tpu.memory_space<vmem>>, vector<1x128xf32>,
    } else {
    }
    return
  }
  func.func @transform_0(%arg0: i32) -> (i32, i32) {
    %c0_i32 = arith.constant 0 : i32
    %c0_i32_0 = arith.constant 0 : i32
    return %arg0, %c0_i32 : i32, i32
  }
  func.func @transform_1(%arg0: i32) -> (i32, i32) {
    %c0_i32 = arith.constant 0 : i32
    %c0_i32_0 = arith.constant 0 : i32
    %c0_i32_1 = arith.constant 0 : i32
    return %c0_i32, %c0_i32_0 : i32, i32
  }
  func.func @transform_2(%arg0: i32) -> (i32, i32) {
    %c0_i32 = arith.constant 0 : i32
    %c0_i32_0 = arith.constant 0 : i32
    %c0_i32_1 = arith.constant 0 : i32
    return %c0_i32, %c0_i32_0 : i32, i32
  }
  func.func @transform_3(%arg0: i32) -> (i32, i32) {
    %c0_i32 = arith.constant 0 : i32
    %c0_i32_0 = arith.constant 0 : i32
    %c0_i32_1 = arith.constant 0 : i32
    return %c0_i32, %c0_i32_0 : i32, i32
  }
  func.func @transform_4(%arg0: i32) -> (i32, i32) {
    %c0_i32 = arith.constant 0 : i32
    %c0_i32_0 = arith.constant 0 : i32
    %c0_i32_1 = arith.constant 0 : i32
    return %c0_i32, %c0_i32_0 : i32, i32
  }
  func.func @transform_5(%arg0: i32) -> (i32, i32) {
    %c0_i32 = arith.constant 0 : i32
    %c0_i32_0 = arith.constant 0 : i32
    %c0_i32_1 = arith.constant 0 : i32
    return %c0_i32, %c0_i32_0 : i32, i32
  }
}

</mosaic_0001>

<llo_original>
// kernel: tpu_custom_call.1
$region0: #{tpu_custom_call.1}
  #allocation0 [shape = 'u32[]', space=smem, size = 0x4, offset = 0x4, fixed_abs, tag = 'smem constant byte address 0x4 - core index']
  #allocation1 [shape = 'u32[72,128]{1,0:T(1,128)}', space=vmem, size = 0x9000, scoped, tag = 'internal scratch']
  #allocation2 [shape = 'f32[8,128]{1,0:T(8,128)}', space=vmem, size = 0x1000, scoped, tag = 'scratch operand']
  #allocation3 [shape = 'f32[8,128]{1,0:T(8,128)}', space=vmem, size = 0x1000, scoped, tag = 'scratch operand']
  %s0 = inlined_call_operand.hbm [shape: f32[16,32], index: 0, kind: input, shape index: {}]
  %s1 = inlined_call_operand.hbm [shape: bf16[32,128], index: 1, kind: input, shape index: {}]
  %s2 = inlined_call_operand.vmem [shape: f32[1,128], index: 2, kind: input, shape index: {}]
  %s3 = inlined_call_operand.vmem [shape: f32[1,128], index: 3, kind: input, shape index: {}]
  %s4 = inlined_call_operand.hbm [shape: f32[1,128], index: 4, kind: output, shape index: {0}]
  %s5 = inlined_call_operand.hbm [shape: f32[1,128], index: 5, kind: output, shape index: {1}]
  %6 = xla_tuple %s4, %s5
  %s7 = sld [smem:[#allocation0]]
  $region50: #{tpu_custom_call.1} parent=0
    _
  %s9 = ssub.s32 1, %s7
  %s10 = scalar_select 0, %s9, %s7
  $region1: #{tpu_custom_call.1} parent=0
    #allocation4 [shape = 'u8[8192]{0}', space=vmem, size = 0x2000, scoped, tag = 'input window, operand 0, single buffered']
    #allocation5 [shape = 's32[1]{0}', space=sflag, size = 0x4, scoped, tag = 'scoped memory for tpu_custom_call.1']
    #allocation6 [shape = 's32[1]{0}', space=sflag, size = 0x4, scoped, tag = 'scoped memory for tpu_custom_call.1']
    #allocation7 [shape = 'u8[8192]{0}', space=vmem, size = 0x2000, scoped, tag = 'input window, operand 1, single buffered']
    #allocation8 [shape = 's32[1]{0}', space=sflag, size = 0x4, scoped, tag = 'scoped memory for tpu_custom_call.1']
    #allocation9 [shape = 'u8[512]{0}', space=vmem, size = 0x400, scoped, tag = 'output window, operand 0, single buffered']
    #allocation10 [shape = 'u8[512]{0}', space=vmem, size = 0x400, scoped, tag = 'output window, operand 1, single buffered']
    #allocation11 [shape = 's32[1]{0}', space=sflag, size = 0x4, scoped, tag = 'scoped memory for tpu_custom_call.1']
    %11 = vsyncpa [#allocation5], 0
    %12 = vsyncpa [#allocation8], 0
    %13 = vsyncpa [#allocation6], 0
    %14 = vsyncpa [#allocation11], 0
    // Predicated region
    $region2: #{tpu_custom_call.1} parent=1 // pred_check
      _
    $region3: #{tpu_custom_call.1} parent=1 // pred_check_branch
      %16 = sbr.rel (0) target = $region5
    $region4: #{tpu_custom_call.1} parent=1 // pred_region
      %18 = vsyncadd [#allocation5], 0
      %s19 = sshll.u32 %s0, 4
      %s20 = int_to_ptr.hbm [resolvable:$true] %s19
      %s21 = sshll.u32 [#allocation4], 4
      %s22 = int_to_ptr.vmem [resolvable:$true] %s21
      %27 = dma.hbm_to_vmem [thread:$0]  %s20, 256, %s22, [#allocation5], 128, 128, 8
    $region5: #{tpu_custom_call.1} parent=1 // pred_fallthru
      _
    // Predicated region
    $region6: #{tpu_custom_call.1} parent=1 // pred_check
      _
    $region7: #{tpu_custom_call.1} parent=1 // pred_check_branch
      %29 = sbr.rel (0) target = $region9
    $region8: #{tpu_custom_call.1} parent=1 // pred_region
      %31 = vsyncadd [#allocation8], 0
      %s32 = sshll.u32 %s1, 4
      %s33 = int_to_ptr.hbm [resolvable:$true] %s32
      %s34 = sshll.u32 [#allocation7], 4
      %s35 = int_to_ptr.vmem [resolvable:$true] %s34
      %40 = dma.hbm_to_vmem [thread:$0]  %s33, 256, %s35, [#allocation8], 64, 64, 4
    $region9: #{tpu_custom_call.1} parent=1 // pred_fallthru
      _
    // Predicated region
    $region10: #{tpu_custom_call.1} parent=1 // pred_check
      _
    $region11: #{tpu_custom_call.1} parent=1 // pred_check_branch
      %42 = sbr.rel (0) target = $region13
    $region12: #{tpu_custom_call.1} parent=1 // pred_region
      _
    $region13: #{tpu_custom_call.1} parent=1 // pred_fallthru
      _
    // Predicated region
    $region14: #{tpu_custom_call.1} parent=1 // pred_check
      _
    $region15: #{tpu_custom_call.1} parent=1 // pred_check_branch
      %44 = sbr.rel (0) target = $region17
    $region16: #{tpu_custom_call.1} parent=1 // pred_region
      _
    $region17: #{tpu_custom_call.1} parent=1 // pred_fallthru
      _
    // Predicated region
    $region18: #{tpu_custom_call.1} parent=1 // pred_check
      _
    $region19: #{tpu_custom_call.1} parent=1 // pred_check_branch
      %46 = sbr.rel (0) target = $region21
    $region20: #{tpu_custom_call.1} parent=1 // pred_region
      %48 = dma.done [#allocation5], 256
    $region21: #{tpu_custom_call.1} parent=1 // pred_fallthru
      _
    // Predicated region
    $region22: #{tpu_custom_call.1} parent=1 // pred_check
      _
    $region23: #{tpu_custom_call.1} parent=1 // pred_check_branch
      %50 = sbr.rel (0) target = $region25
    $region24: #{tpu_custom_call.1} parent=1 // pred_region
      %52 = dma.done [#allocation8], 256
    $region25: #{tpu_custom_call.1} parent=1 // pred_fallthru
      _
    %p54 = scmp.eq.s32.totalorder 0, 0
    // Predicated region
    $region26: #{tpu_custom_call.1} parent=1 // pred_check
      %p55 = pneg %p54
    $region27: #{tpu_custom_call.1} parent=1 // pred_check_branch
      %57 = sbr.rel (%p55) target = $region29
    $region28: #{tpu_custom_call.1} parent=1 // pred_region
      %58 = vst [vmem:[#allocation2] sm:$0xff] 0.0
      %59 = vst [vmem:[#allocation3] sm:$0xff] 0.0
    $region29: #{tpu_custom_call.1} parent=1 // pred_fallthru
      _
    %v60 = vld [vmem:[#allocation4] sm:$0xff]
    %v61 = vld [vmem:[#allocation4 + $0x8] sm:$0xff]
    %v62 = vpack.c.bf16 %v61, %v60
    %v63 = vld [vmem:[#allocation7] sm:$0xf]
    %v64 = vld [vmem:[#allocation7 + $0x4] sm:$0xf]
    %v65 = vld [vmem:[#allocation7 + $0x8] sm:$0xf]
    %v66 = vld [vmem:[#allocation7 + $0xc] sm:$0xf]
    %v71 = vunpack.c.l.b16 %v63
    %v72 = vunpack.c.l.b16 %v64
    %v73 = vunpack.c.l.b16 %v65
    %v74 = vunpack.c.l.b16 %v66
    %v75 = vpack.c.b16 %v72, %v71
    %v76 = vpack.c.b16 %v74, %v73
    %vm79 = vcmask 261120
    %v81 = vsel %vm79, %v62, 0
    %83 = vmatpush.bf16.msra.mxu0 0
    %84 = vmatpush.bf16.msra.mxu0 0
    %85 = vmatpush.bf16.msra.mxu0 0
    %86 = vmatpush.bf16.msra.mxu0 0
    %87 = vmatpush.bf16.msra.mxu0 0
    %88 = vmatpush.bf16.msra.mxu0 0
    %89 = vmatpush.bf16.msra.mxu0 %v76
    %90 = vmatpush.bf16.msra.mxu0 %v75
    %91 = vmatmul.bf16.gmra.mxu0 %v81
    %v92 = vpop.f32.mrf.mxu0
    %v93 = vadd.f32 0.0, %v92
    %v94 = vpop.f32.mrf.mxu0
    %v95 = vadd.f32 0.0, %v94
    %96 = vdwg.mxu0
    %v97 = vmul.f32 %v93, %v93
    %v98 = vmul.f32 %v95, %v95
    %v99 = vld [vmem:[#allocation2] sm:$0xff]
    %v100 = vadd.f32 %v93, %v95
    %v101 = vadd.f32 %v99, %v100
    %102 = vst [vmem:[#allocation2] sm:$0xff] %v101
    %v103 = vld [vmem:[#allocation3] sm:$0xff]
    %v104 = vadd.f32 %v97, %v98
    %v105 = vadd.f32 %v103, %v104
    %106 = vst [vmem:[#allocation3] sm:$0xff] %v105
    // Predicated region
    $region30: #{tpu_custom_call.1} parent=1 // pred_check
      %p107 = pneg %p54
    $region31: #{tpu_custom_call.1} parent=1 // pred_check_branch
      %109 = sbr.rel (%p107) target = $region33
    $region32: #{tpu_custom_call.1} parent=1 // pred_region
      %v110 = vld [vmem:[#allocation2] sm:$0xff]
      %v111 = vrot.slane %v110, 4
      %v112 = vadd.f32 %v110, %v111
      %v113 = vrot.slane %v112, 2
      %v114 = vadd.f32 %v112, %v113
      %v115 = vrot.slane %v114, 1
      %v116 = vadd.f32 %v114, %v115
      %v117 = vmul.f32 %v116, 0.0625
      %v118 = vld [vmem:[#allocation3] sm:$0xff]
      %v119 = vrot.slane %v118, 4
      %v120 = vadd.f32 %v118, %v119
      %v121 = vrot.slane %v120, 2
      %v122 = vadd.f32 %v120, %v121
      %v123 = vrot.slane %v122, 1
      %v124 = vadd.f32 %v122, %v123
      %v125 = vmul.f32 %v124, 0.0625
      %v126 = vmul.f32 %v117, %v117
      %v127 = vsub.f32 %v125, %v126
      %v128 = vmax.f32 %v127, 0.0
      %v129 = vadd.f32 %v128, 0.001
      %v130 = vrsqrt.pop %v129
      %v131 = vmul.f32 %v130, %v129
      %v132 = vmul.f32 %v131, %v130
      %v133 = vmul.f32 0.5, %v132
      %v134 = vsub.f32 1.5, %v133
      %v135 = vmul.f32 %v130, %v134
      %vm136 = vweird.f32 %v129
      %vm137 = vweird.f32 %v130
      %vm138 = vmor %vm136, %vm137
      %v139 = vsel %vm138, %v130, %v135
      %v140 = vld [vmem:[%s2] sm:$0x1]
      %v141 = vmul.f32 %v139, %v140
      %142 = vst [vmem:[#allocation9] sm:$0x1] %v141
      %v143 = vld [vmem:[%s3] sm:$0x1]
      %v144 = vmul.f32 %v117, %v141
      %v145 = vsub.f32 %v143, %v144
      %146 = vst [vmem:[#allocation10] sm:$0x1] %v145
    $region33: #{tpu_custom_call.1} parent=1 // pred_fallthru
      _
    // Predicated region
    $region34: #{tpu_custom_call.1} parent=1 // pred_check
      _
    $region35: #{tpu_custom_call.1} parent=1 // pred_check_branch
      %148 = sbr.rel (0) target = $region37
    $region36: #{tpu_custom_call.1} parent=1 // pred_region
      %150 = vsyncadd [#allocation6], 0
      %s152 = sshll.u32 [#allocation9], 4
      %s153 = int_to_ptr.vmem [resolvable:$true] %s152
      %s154 = sshll.u32 %s4, 4
      %s155 = int_to_ptr.hbm [resolvable:$true] %s154
      %157 = dma.vmem_to_hbm [thread:$0]  %s153, 16, %s155, [#allocation6]
    $region37: #{tpu_custom_call.1} parent=1 // pred_fallthru
      _
    // Predicated region
    $region38: #{tpu_custom_call.1} parent=1 // pred_check
      _
    $region39: #{tpu_custom_call.1} parent=1 // pred_check_branch
      %159 = sbr.rel (0) target = $region41
    $region40: #{tpu_custom_call.1} parent=1 // pred_region
      %161 = vsyncadd [#allocation11], 0
      %s163 = sshll.u32 [#allocation10], 4
      %s164 = int_to_ptr.vmem [resolvable:$true] %s163
      %s165 = sshll.u32 %s5, 4
      %s166 = int_to_ptr.hbm [resolvable:$true] %s165
      %168 = dma.vmem_to_hbm [thread:$0]  %s164, 16, %s166, [#allocation11]
    $region41: #{tpu_custom_call.1} parent=1 // pred_fallthru
      _
    // Predicated region
    $region42: #{tpu_custom_call.1} parent=1 // pred_check
      _
    $region43: #{tpu_custom_call.1} parent=1 // pred_check_branch
      %170 = sbr.rel (0) target = $region45
    $region44: #{tpu_custom_call.1} parent=1 // pred_region
      %172 = dma.done [#allocation6], 16
    $region45: #{tpu_custom_call.1} parent=1 // pred_fallthru
      _
    // Predicated region
    $region46: #{tpu_custom_call.1} parent=1 // pred_check
      _
    $region47: #{tpu_custom_call.1} parent=1 // pred_check_branch
      %174 = sbr.rel (0) target = $region49
    $region48: #{tpu_custom_call.1} parent=1 // pred_region
      %176 = dma.done [#allocation11], 16
    $region49: #{tpu_custom_call.1} parent=1 // pred_fallthru
      _
    %177 = vsyncpa [#allocation5], 1
    %178 = vsyncpa [#allocation8], 1
    %179 = vsyncpa [#allocation6], 1
    %180 = vsyncpa [#allocation11], 1

</llo_original>
